<compile_context>
chip_gen: v7x
topology: tpu7x:2x2x1
jax: 0.10.0
libtpu: 0.0.40
codegen_flags: <defaults>
</compile_context>

<pallas_src>
import jax
import jax.numpy as jnp
from jax.experimental import pallas as pl
from jax.experimental.pallas import tpu as pltpu


def _round_up(x, m):
    return ((x + m - 1) // m) * m


def _margin_ce_kernel(margin_ref, nclass_ref, feat_ref, centers_t_ref,
                      label_ref, loss_ref):
    # margin_ref:    (1, 1)         f32  SMEM scalar
    # nclass_ref:    (1, 1)         i32  SMEM scalar (valid class count C)
    # feat_ref:      (TB, D_pad)    bf16
    # centers_t_ref: (D_pad, C_pad) bf16 (transposed normalized centers, resident)
    # label_ref:     (TB, 1)        i32
    # loss_ref:      (TB, 1)        f32  per-sample CE loss (reduce=False)
    margin = margin_ref[0, 0]
    n_valid = nclass_ref[0, 0]

    # Hot path 1: cosine-style logits on the MXU (bf16 in, f32 accumulate).
    logits = jnp.dot(feat_ref[...], centers_t_ref[...],
                     preferred_element_type=jnp.float32)          # (TB, C_pad) f32
    tb, c_pad = logits.shape

    cls_idx = jax.lax.broadcasted_iota(jnp.int32, (tb, c_pad), 1)
    is_target = cls_idx == label_ref[...]                         # bool (TB, C_pad)
    is_valid = cls_idx < n_valid                                  # padded cols -> False

    # Margin only on the target class; kill padded class columns for the LSE.
    logits = jnp.where(is_target, logits - margin, logits)
    logits = jnp.where(is_valid, logits, -jnp.inf)

    # Hot path 2: stable per-sample cross entropy (log-sum-exp in f32).
    m = jnp.max(logits, axis=-1, keepdims=True)
    lse = m + jnp.log(jnp.sum(jnp.exp(logits - m), axis=-1, keepdims=True))
    target_logit = jnp.sum(jnp.where(is_target, logits, 0.0),
                           axis=-1, keepdims=True)
    loss_ref[...] = lse - target_logit


def margin_loss_forward(feature, label, centers, margin, *, batch_tile=512):
    """feature: (B, D) f32, label: (B,) int, centers: (C, D) f32 (row-normalized).

    Returns (loss: (B,) f32, mask: (B, C) bool)  — mask == create_mask(B, label).
    """
    B, D = feature.shape
    C = centers.shape[0]

    # Lane/MXU-friendly padded shapes.
    C_pad = _round_up(C, 128)
    D_pad = _round_up(D, 128)
    TB = min(int(batch_tile), _round_up(B, 8))
    B_pad = _round_up(B, TB)
    grid = (B_pad // TB,)

    # Wrapper-side padding / casting (zeros in the padded K dim contribute nothing).
    feat_p = jnp.zeros((B_pad, D_pad), jnp.bfloat16)
    feat_p = feat_p.at[:B, :D].set(feature.astype(jnp.bfloat16))
    centers_t_p = jnp.zeros((D_pad, C_pad), jnp.bfloat16)
    centers_t_p = centers_t_p.at[:D, :C].set(centers.T.astype(jnp.bfloat16))
    label_p = jnp.zeros((B_pad, 1), jnp.int32)
    label_p = label_p.at[:B, 0].set(label.astype(jnp.int32))
    margin_s = jnp.full((1, 1), float(margin), jnp.float32)
    nclass_s = jnp.full((1, 1), C, jnp.int32)

    # VMEM budget: feature double-buffer + centers (budgeted x2) + label/loss
    # + f32 logits temporaries, with ~30% headroom; capped at v7x's 64 MiB.
    vmem_need = (2 * TB * D_pad * 2
                 + 2 * D_pad * C_pad * 2
                 + 2 * TB * 4 + 2 * TB * 4
                 + 8 * TB * C_pad * 4)
    vmem_limit = int(min(64 * 1024 * 1024,
                         max(16 * 1024 * 1024, vmem_need * 1.3)))

    cost = pl.CostEstimate(
        flops=2 * B_pad * D_pad * C_pad,
        transcendentals=B_pad * C_pad + B_pad,          # exp row-wise + log
        bytes_accessed=(B_pad * D_pad * 2 + D_pad * C_pad * 2
                        + B_pad * 4 + B_pad * 4))

    def _run(centers_pipeline_mode):
        centers_kwargs = {}
        if centers_pipeline_mode is not None:
            centers_kwargs["pipeline_mode"] = centers_pipeline_mode
        in_specs = [
            pl.BlockSpec(memory_space=pltpu.MemorySpace.SMEM),      # margin
            pl.BlockSpec(memory_space=pltpu.MemorySpace.SMEM),      # num_classes
            pl.BlockSpec((TB, D_pad), lambda i: (i, 0)),            # feature tile
            pl.BlockSpec((D_pad, C_pad), lambda i: (0, 0),          # resident centers
                         **centers_kwargs),
            pl.BlockSpec((TB, 1), lambda i: (i, 0)),                # labels
        ]
        out_specs = pl.BlockSpec((TB, 1), lambda i: (i, 0))
        return pl.pallas_call(
            _margin_ce_kernel,
            out_shape=jax.ShapeDtypeStruct((B_pad, 1), jnp.float32),
            grid=grid,
            in_specs=in_specs,
            out_specs=out_specs,
            compiler_params=pltpu.CompilerParams(
                dimension_semantics=("parallel",),
                vmem_limit_bytes=vmem_limit),
            cost_estimate=cost,
        )(margin_s, nclass_s, feat_p, centers_t_p, label_p)

    try:
        # Centers block index never changes -> single-buffer it to halve its
        # VMEM footprint (matters for large C on v7x's 64 MiB VMEM).
        loss_p = _run(pl.Buffered(1))
    except Exception:
        # Fallback: default double-buffered pipelining for the centers block.
        loss_p = _run(None)

    loss = loss_p[:B, 0]

    # create_mask: plain XLA one-hot (pure function of label; kept out of the
    # kernel so the kernel writes only the per-sample loss stream).
    mask = label.astype(jnp.int32)[:, None] == jnp.arange(C, dtype=jnp.int32)[None, :]
    return loss, mask


def init_centers(key, num_classes, dim_feature):
    """nn.Parameter(F.normalize(torch.randn(C, D), dim=1)) — deterministic."""
    c = jax.random.normal(key, (num_classes, dim_feature), dtype=jnp.float32)
    norm = jnp.sqrt(jnp.sum(c * c, axis=1, keepdims=True))
    return c / jnp.maximum(norm, 1e-12)


if __name__ == "__main__":
    # Small shapes consistent with the module: dim_feature=32, num_classes=16.
    B, D, C = 8, 32, 16
    margin = 0.35

    key = jax.random.PRNGKey(0)
    k_feat, k_lab, k_cent = jax.random.split(key, 3)

    feature = jax.random.normal(k_feat, (B, D), dtype=jnp.float32)
    label = jax.random.randint(k_lab, (B,), 0, C, dtype=jnp.int32)
    centers = init_centers(k_cent, C, D)

    loss, mask = margin_loss_forward(feature, label, centers, margin)
    jax.block_until_ready((loss, mask))

    # Reference 1: same bf16 input rounding as the kernel's MXU path.
    onehot_ref = jax.nn.one_hot(label, C, dtype=jnp.float32)
    logits_bf = jnp.dot(feature.astype(jnp.bfloat16),
                        centers.T.astype(jnp.bfloat16),
                        preferred_element_type=jnp.float32)
    logits_bf = logits_bf - margin * onehot_ref
    loss_ref_bf = (jax.scipy.special.logsumexp(logits_bf, axis=-1)
                   - jnp.sum(logits_bf * onehot_ref, axis=-1))

    # Reference 2: full f32 semantics (loose tolerance for bf16 inputs).
    logits_f32 = feature @ centers.T - margin * onehot_ref
    loss_ref_f32 = (jax.scipy.special.logsumexp(logits_f32, axis=-1)
                    - jnp.sum(logits_f32 * onehot_ref, axis=-1))

    assert jnp.allclose(loss, loss_ref_bf, atol=1e-3, rtol=1e-3), (loss, loss_ref_bf)
    assert jnp.allclose(loss, loss_ref_f32, atol=5e-2, rtol=5e-2), (loss, loss_ref_f32)
    assert jnp.array_equal(mask, onehot_ref.astype(bool))
    print("KERNEL_OK")
</pallas_src>

<mosaic_0001>
module attributes {stable_mosaic.version = 11 : i64} {
  func.func @_margin_ce_kernel(%arg0: i32, %arg1: memref<1x1xf32, #tpu.memory_space<smem>>, %arg2: memref<1x1xi32, #tpu.memory_space<smem>>, %arg3: memref<8x128xbf16, #tpu.memory_space<vmem>>, %arg4: memref<128x128xbf16, #tpu.memory_space<vmem>>, %arg5: memref<8x1xi32, #tpu.memory_space<vmem>>, %arg6: memref<8x1xf32, #tpu.memory_space<vmem>>) attributes {dimension_semantics = [#tpu.dimension_semantics<parallel>], iteration_bounds = array<i64: 1>, scalar_prefetch = 0 : i64, scratch_operands = 0 : i64, tpu.core_type = #tpu.core_type<tc>, window_params = [{transform_indices = @transform_0, window_bounds = array<i64: 1, 1>}, {transform_indices = @transform_1, window_bounds = array<i64: 1, 1>}, {transform_indices = @transform_2, window_bounds = array<i64: 8, 128>}, {pipeline_mode = #tpu.pipeline_mode<synchronous>, transform_indices = @transform_3, window_bounds = array<i64: 128, 128>}, {transform_indices = @transform_4, window_bounds = array<i64: 8, 1>}, {transform_indices = @transform_5, window_bounds = array<i64: 8, 1>}]} {
    %c0 = arith.constant 0 : index
    %c0_0 = arith.constant 0 : index
    %0 = memref.load %arg1[%c0, %c0_0] : memref<1x1xf32, #tpu.memory_space<smem>>
    %c0_1 = arith.constant 0 : index
    %c0_2 = arith.constant 0 : index
    %1 = memref.load %arg2[%c0_1, %c0_2] : memref<1x1xi32, #tpu.memory_space<smem>>
    %c0_3 = arith.constant 0 : index
    %c0_4 = arith.constant 0 : index
    %2 = vector.load %arg3[%c0_3, %c0_4] : memref<8x128xbf16, #tpu.memory_space<vmem>>, vector<8x128xbf16>
    %c0_5 = arith.constant 0 : index
    %c0_6 = arith.constant 0 : index
    %3 = vector.load %arg4[%c0_5, %c0_6] : memref<128x128xbf16, #tpu.memory_space<vmem>>, vector<128x128xbf16>
    %cst = arith.constant dense<0.000000e+00> : vector<8x128xf32>
    %4 = tpu.matmul %2, %3, %cst {dimension_numbers = #tpu.dot_dimension_numbers<[1], [0], [0], [1], [0, 0, 1, 1], [], []>} : vector<8x128xbf16>, vector<128x128xbf16>, vector<8x128xf32> -> vector<8x128xf32>
    %5 = tpu.iota {dimensions = array<i32: 1>} : vector<8x128xi32>
    %c0_7 = arith.constant 0 : index
    %c0_8 = arith.constant 0 : index
    %6 = vector.load %arg5[%c0_7, %c0_8] : memref<8x1xi32, #tpu.memory_space<vmem>>, vector<8x1xi32>
    %7 = vector.broadcast %6 : vector<8x1xi32> to vector<8x128xi32>
    %8 = arith.cmpi eq, %5, %7 : vector<8x128xi32>
    %9 = vector.broadcast %1 : i32 to vector<8x128xi32>
    %10 = arith.cmpi slt, %5, %9 : vector<8x128xi32>
    %11 = vector.broadcast %0 : f32 to vector<8x128xf32>
    %12 = arith.subf %4, %11 : vector<8x128xf32>
    %13 = arith.select %8, %12, %4 : vector<8x128xi1>, vector<8x128xf32>
    %cst_9 = arith.constant 0xFF800000 : f32
    %14 = vector.broadcast %cst_9 : f32 to vector<8x128xf32>
    %15 = arith.select %10, %13, %14 : vector<8x128xi1>, vector<8x128xf32>
    %cst_10 = arith.constant dense<0xFF800000> : vector<8xf32>
    %16 = vector.multi_reduction <maximumf>, %15, %cst_10 [1] : vector<8x128xf32> to vector<8xf32>
    %17 = vector.shape_cast %16 : vector<8xf32> to vector<8x1xf32>
    %18 = vector.broadcast %17 : vector<8x1xf32> to vector<8x128xf32>
    %19 = arith.subf %15, %18 : vector<8x128xf32>
    %20 = math.exp %19 : vector<8x128xf32>
    %cst_11 = arith.constant dense<0.000000e+00> : vector<8xf32>
    %21 = vector.multi_reduction <add>, %20, %cst_11 [1] : vector<8x128xf32> to vector<8xf32>
    %22 = vector.shape_cast %21 : vector<8xf32> to vector<8x1xf32>
    %23 = math.log %22 : vector<8x1xf32>
    %24 = arith.addf %17, %23 : vector<8x1xf32>
    %cst_12 = arith.constant 0.000000e+00 : f32
    %25 = vector.broadcast %cst_12 : f32 to vector<8x128xf32>
    %26 = arith.select %8, %15, %25 : vector<8x128xi1>, vector<8x128xf32>
    %cst_13 = arith.constant dense<0.000000e+00> : vector<8xf32>
    %27 = vector.multi_reduction <add>, %26, %cst_13 [1] : vector<8x128xf32> to vector<8xf32>
    %28 = vector.shape_cast %27 : vector<8xf32> to vector<8x1xf32>
    %29 = arith.subf %24, %28 : vector<8x1xf32>
    %c0_14 = arith.constant 0 : index
    %c0_15 = arith.constant 0 : index
    %30 = vector.load %arg6[%c0_14, %c0_15] : memref<8x1xf32, #tpu.memory_space<vmem>>, vector<8x1xf32>
    tpu.vector_store %arg6[%c0_14, %c0_15], %29 {strides = array<i32>} : memref<8x1xf32, #tpu.memory_space<vmem>>, vector<8x1xf32>,
    return
  }
  func.func @transform_0(%arg0: i32) -> (i32, i32) {
    %c0_i32 = arith.constant 0 : i32
    %c0_i32_0 = arith.constant 0 : i32
    %c0_i32_1 = arith.constant 0 : i32
    return %c0_i32, %c0_i32_0 : i32, i32
  }
  func.func @transform_1(%arg0: i32) -> (i32, i32) {
    %c0_i32 = arith.constant 0 : i32
    %c0_i32_0 = arith.constant 0 : i32
    %c0_i32_1 = arith.constant 0 : i32
    return %c0_i32, %c0_i32_0 : i32, i32
  }
  func.func @transform_2(%arg0: i32) -> (i32, i32) {
    %c0_i32 = arith.constant 0 : i32
    %c0_i32_0 = arith.constant 0 : i32
    return %arg0, %c0_i32 : i32, i32
  }
  func.func @transform_3(%arg0: i32) -> (i32, i32) {
    %c0_i32 = arith.constant 0 : i32
    %c0_i32_0 = arith.constant 0 : i32
    %c0_i32_1 = arith.constant 0 : i32
    return %c0_i32, %c0_i32_0 : i32, i32
  }
  func.func @transform_4(%arg0: i32) -> (i32, i32) {
    %c0_i32 = arith.constant 0 : i32
    %c0_i32_0 = arith.constant 0 : i32
    return %arg0, %c0_i32 : i32, i32
  }
  func.func @transform_5(%arg0: i32) -> (i32, i32) {
    %c0_i32 = arith.constant 0 : i32
    %c0_i32_0 = arith.constant 0 : i32
    return %arg0, %c0_i32 : i32, i32
  }
}

module attributes {stable_mosaic.version = 11 : i64} {
  func.func @_margin_ce_kernel(%arg0: i32, %arg1: memref<1x1xf32, #tpu.memory_space<smem>>, %arg2: memref<1x1xi32, #tpu.memory_space<smem>>, %arg3: memref<8x128xbf16, #tpu.memory_space<vmem>>, %arg4: memref<128x128xbf16, #tpu.memory_space<vmem>>, %arg5: memref<8x1xi32, #tpu.memory_space<vmem>>, %arg6: memref<8x1xf32, #tpu.memory_space<vmem>>) attributes {dimension_semantics = [#tpu.dimension_semantics<parallel>], iteration_bounds = array<i64: 1>, scalar_prefetch = 0 : i64, scratch_operands = 0 : i64, tpu.core_type = #tpu.core_type<tc>, window_params = [{transform_indices = @transform_0, window_bounds = array<i64: 1, 1>}, {transform_indices = @transform_1, window_bounds = array<i64: 1, 1>}, {transform_indices = @transform_2, window_bounds = array<i64: 8, 128>}, {pipeline_mode = #tpu.pipeline_mode<synchronous>, transform_indices = @transform_3, window_bounds = array<i64: 128, 128>}, {transform_indices = @transform_4, window_bounds = array<i64: 8, 1>}, {transform_indices = @transform_5, window_bounds = array<i64: 8, 1>}]} {
    %c0 = arith.constant 0 : index
    %c0_0 = arith.constant 0 : index
    %0 = memref.load %arg1[%c0, %c0_0] : memref<1x1xf32, #tpu.memory_space<smem>>
    %c0_1 = arith.constant 0 : index
    %c0_2 = arith.constant 0 : index
    %1 = memref.load %arg2[%c0_1, %c0_2] : memref<1x1xi32, #tpu.memory_space<smem>>
    %c0_3 = arith.constant 0 : index
    %c0_4 = arith.constant 0 : index
    %2 = vector.load %arg3[%c0_3, %c0_4] : memref<8x128xbf16, #tpu.memory_space<vmem>>, vector<8x128xbf16>
    %c0_5 = arith.constant 0 : index
    %c0_6 = arith.constant 0 : index
    %3 = vector.load %arg4[%c0_5, %c0_6] : memref<128x128xbf16, #tpu.memory_space<vmem>>, vector<128x128xbf16>
    %cst = arith.constant dense<0.000000e+00> : vector<8x128xf32>
    %4 = tpu.matmul %2, %3, %cst {dimension_numbers = #tpu.dot_dimension_numbers<[1], [0], [0], [1], [0, 0, 1, 1], [], []>} : vector<8x128xbf16>, vector<128x128xbf16>, vector<8x128xf32> -> vector<8x128xf32>
    %5 = tpu.iota {dimensions = array<i32: 1>} : vector<8x128xi32>
    %c0_7 = arith.constant 0 : index
    %c0_8 = arith.constant 0 : index
    %6 = vector.load %arg5[%c0_7, %c0_8] : memref<8x1xi32, #tpu.memory_space<vmem>>, vector<8x1xi32>
    %7 = vector.broadcast %6 : vector<8x1xi32> to vector<8x128xi32>
    %8 = arith.cmpi eq, %5, %7 : vector<8x128xi32>
    %9 = vector.broadcast %1 : i32 to vector<8x128xi32>
    %10 = arith.cmpi slt, %5, %9 : vector<8x128xi32>
    %11 = vector.broadcast %0 : f32 to vector<8x128xf32>
    %12 = arith.subf %4, %11 : vector<8x128xf32>
    %13 = arith.select %8, %12, %4 : vector<8x128xi1>, vector<8x128xf32>
    %cst_9 = arith.constant 0xFF800000 : f32
    %14 = vector.broadcast %cst_9 : f32 to vector<8x128xf32>
    %15 = arith.select %10, %13, %14 : vector<8x128xi1>, vector<8x128xf32>
    %cst_10 = arith.constant dense<0xFF800000> : vector<8xf32>
    %16 = vector.multi_reduction <maximumf>, %15, %cst_10 [1] : vector<8x128xf32> to vector<8xf32>
    %17 = vector.shape_cast %16 : vector<8xf32> to vector<8x1xf32>
    %18 = vector.broadcast %17 : vector<8x1xf32> to vector<8x128xf32>
    %19 = arith.subf %15, %18 : vector<8x128xf32>
    %20 = math.exp %19 : vector<8x128xf32>
    %cst_11 = arith.constant dense<0.000000e+00> : vector<8xf32>
    %21 = vector.multi_reduction <add>, %20, %cst_11 [1] : vector<8x128xf32> to vector<8xf32>
    %22 = vector.shape_cast %21 : vector<8xf32> to vector<8x1xf32>
    %23 = math.log %22 : vector<8x1xf32>
    %24 = arith.addf %17, %23 : vector<8x1xf32>
    %cst_12 = arith.constant 0.000000e+00 : f32
    %25 = vector.broadcast %cst_12 : f32 to vector<8x128xf32>
    %26 = arith.select %8, %15, %25 : vector<8x128xi1>, vector<8x128xf32>
    %cst_13 = arith.constant dense<0.000000e+00> : vector<8xf32>
    %27 = vector.multi_reduction <add>, %26, %cst_13 [1] : vector<8x128xf32> to vector<8xf32>
    %28 = vector.shape_cast %27 : vector<8xf32> to vector<8x1xf32>
    %29 = arith.subf %24, %28 : vector<8x1xf32>
    %c0_14 = arith.constant 0 : index
    %c0_15 = arith.constant 0 : index
    %30 = vector.load %arg6[%c0_14, %c0_15] : memref<8x1xf32, #tpu.memory_space<vmem>>, vector<8x1xf32>
    tpu.vector_store %arg6[%c0_14, %c0_15], %29 {strides = array<i32>} : memref<8x1xf32, #tpu.memory_space<vmem>>, vector<8x1xf32>,
    return
  }
  func.func @transform_0(%arg0: i32) -> (i32, i32) {
    %c0_i32 = arith.constant 0 : i32
    %c0_i32_0 = arith.constant 0 : i32
    %c0_i32_1 = arith.constant 0 : i32
    return %c0_i32, %c0_i32_0 : i32, i32
  }
  func.func @transform_1(%arg0: i32) -> (i32, i32) {
    %c0_i32 = arith.constant 0 : i32
    %c0_i32_0 = arith.constant 0 : i32
    %c0_i32_1 = arith.constant 0 : i32
    return %c0_i32, %c0_i32_0 : i32, i32
  }
  func.func @transform_2(%arg0: i32) -> (i32, i32) {
    %c0_i32 = arith.constant 0 : i32
    %c0_i32_0 = arith.constant 0 : i32
    return %arg0, %c0_i32 : i32, i32
  }
  func.func @transform_3(%arg0: i32) -> (i32, i32) {
    %c0_i32 = arith.constant 0 : i32
    %c0_i32_0 = arith.constant 0 : i32
    %c0_i32_1 = arith.constant 0 : i32
    return %c0_i32, %c0_i32_0 : i32, i32
  }
  func.func @transform_4(%arg0: i32) -> (i32, i32) {
    %c0_i32 = arith.constant 0 : i32
    %c0_i32_0 = arith.constant 0 : i32
    return %arg0, %c0_i32 : i32, i32
  }
  func.func @transform_5(%arg0: i32) -> (i32, i32) {
    %c0_i32 = arith.constant 0 : i32
    %c0_i32_0 = arith.constant 0 : i32
    return %arg0, %c0_i32 : i32, i32
  }
}

</mosaic_0001>

<llo_original>
// kernel: tpu_custom_call.1
$region0: #{tpu_custom_call.1}
  #allocation0 [shape = 'u32[]', space=smem, size = 0x4, offset = 0x4, fixed_abs, tag = 'smem constant byte address 0x4 - core index']
  #allocation1 [shape = 'u32[144,128]{1,0:T(1,128)}', space=vmem, size = 0x12000, scoped, tag = 'internal scratch']
  #allocation2 [shape = 'f32[1,1]{1,0:T(1,128)S(6)}', space=smem, size = 0x200, scoped, tag = 'scoped memory for tpu_custom_call.1']
  #allocation3 [shape = 's32[1,1]{1,0:T(1,128)S(6)}', space=smem, size = 0x200, scoped, tag = 'scoped memory for tpu_custom_call.1']
  %s0 = inlined_call_operand.<no memory space> [shape: f32[1,1], index: 0, kind: input, shape index: {}]
  %s1 = inlined_call_operand.<no memory space> [shape: s32[1,1], index: 1, kind: input, shape index: {}]
  %s2 = inlined_call_operand.vmem [shape: bf16[8,128], index: 2, kind: input, shape index: {}]
  %s3 = inlined_call_operand.hbm [shape: bf16[128,128], index: 3, kind: input, shape index: {}]
  %s4 = inlined_call_operand.vmem [shape: s32[8,1], index: 4, kind: input, shape index: {}]
  %s5 = inlined_call_operand.vmem [shape: f32[8,1], index: 5, kind: output, shape index: {}]
  %s6 = sld [smem:[#allocation0]]
  $region34: #{tpu_custom_call.1} parent=0
    _
  %s8 = ssub.s32 1, %s6
  %s9 = scalar_select 0, %s8, %s6
  %10 = sst [smem:[#allocation2]] %s0
  %11 = sst [smem:[#allocation3]] %s1
  $region1: #{tpu_custom_call.1} parent=0
    #allocation4 [shape = 'u8[32768]{0}', space=vmem, size = 0x8000, scoped, tag = 'input window, operand 3, single buffered']
    #allocation5 [shape = 's32[1]{0}', space=sflag, size = 0x4, scoped, tag = 'scoped memory for tpu_custom_call.1']
    %12 = vsyncpa [#allocation5], 0
    // Predicated region
    $region2: #{tpu_custom_call.1} parent=1 // pred_check
      _
    $region3: #{tpu_custom_call.1} parent=1 // pred_check_branch
      %14 = sbr.rel (0) target = $region5
    $region4: #{tpu_custom_call.1} parent=1 // pred_region
      _
    $region5: #{tpu_custom_call.1} parent=1 // pred_fallthru
      _
    // Predicated region
    $region6: #{tpu_custom_call.1} parent=1 // pred_check
      _
    $region7: #{tpu_custom_call.1} parent=1 // pred_check_branch
      %16 = sbr.rel (0) target = $region9
    $region8: #{tpu_custom_call.1} parent=1 // pred_region
      _
    $region9: #{tpu_custom_call.1} parent=1 // pred_fallthru
      _
    // Predicated region
    $region10: #{tpu_custom_call.1} parent=1 // pred_check
      _
    $region11: #{tpu_custom_call.1} parent=1 // pred_check_branch
      %18 = sbr.rel (0) target = $region13
    $region12: #{tpu_custom_call.1} parent=1 // pred_region
      _
    $region13: #{tpu_custom_call.1} parent=1 // pred_fallthru
      _
    // Predicated region
    $region14: #{tpu_custom_call.1} parent=1 // pred_check
      _
    $region15: #{tpu_custom_call.1} parent=1 // pred_check_branch
      %20 = sbr.rel (0) target = $region17
    $region16: #{tpu_custom_call.1} parent=1 // pred_region
      %s22 = ssub.s32 1024, 1024
      %23 = vsyncadd [#allocation5], %s22
      %s24 = sshll.u32 [#allocation4], 4
      %s25 = int_to_ptr.vmem [resolvable:$true] %s24
      %30 = dma.hbm_to_vmem [thread:$0]  %s3, 1024, %s25, [#allocation5], 64, 64, 4
    $region17: #{tpu_custom_call.1} parent=1 // pred_fallthru
      _
    // Predicated region
    $region18: #{tpu_custom_call.1} parent=1 // pred_check
      _
    $region19: #{tpu_custom_call.1} parent=1 // pred_check_branch
      %32 = sbr.rel (0) target = $region21
    $region20: #{tpu_custom_call.1} parent=1 // pred_region
      _
    $region21: #{tpu_custom_call.1} parent=1 // pred_fallthru
      _
    // Predicated region
    $region22: #{tpu_custom_call.1} parent=1 // pred_check
      _
    $region23: #{tpu_custom_call.1} parent=1 // pred_check_branch
      %34 = sbr.rel (0) target = $region25
    $region24: #{tpu_custom_call.1} parent=1 // pred_region
      %35 = dma.done [#allocation5], 1024
    $region25: #{tpu_custom_call.1} parent=1 // pred_fallthru
      _
    %s37 = sld [smem:[#allocation2]]
    %s38 = sld [smem:[#allocation3]]
    %v39 = vld [vmem:[%s2] sm:$0xf]
    %v40 = vld [vmem:[#allocation4] sm:$0xf]
    %v41 = vld [vmem:[#allocation4 + $0x4] sm:$0xf]
    %v42 = vld [vmem:[#allocation4 + $0x8] sm:$0xf]
    %v43 = vld [vmem:[#allocation4 + $0xc] sm:$0xf]
    %v44 = vld [vmem:[#allocation4 + $0x10] sm:$0xf]
    %v45 = vld [vmem:[#allocation4 + $0x14] sm:$0xf]
    %v46 = vld [vmem:[#allocation4 + $0x18] sm:$0xf]
    %v47 = vld [vmem:[#allocation4 + $0x1c] sm:$0xf]
    %v48 = vld [vmem:[#allocation4 + $0x20] sm:$0xf]
    %v49 = vld [vmem:[#allocation4 + $0x24] sm:$0xf]
    %v50 = vld [vmem:[#allocation4 + $0x28] sm:$0xf]
    %v51 = vld [vmem:[#allocation4 + $0x2c] sm:$0xf]
    %v52 = vld [vmem:[#allocation4 + $0x30] sm:$0xf]
    %v53 = vld [vmem:[#allocation4 + $0x34] sm:$0xf]
    %v54 = vld [vmem:[#allocation4 + $0x38] sm:$0xf]
    %v55 = vld [vmem:[#allocation4 + $0x3c] sm:$0xf]
    %v72 = vunpack.c.l.b16 %v40
    %v73 = vunpack.c.l.b16 %v41
    %v74 = vunpack.c.l.b16 %v42
    %v75 = vunpack.c.l.b16 %v43
    %v76 = vunpack.c.l.b16 %v44
    %v77 = vunpack.c.l.b16 %v45
    %v78 = vunpack.c.l.b16 %v46
    %v79 = vunpack.c.l.b16 %v47
    %v80 = vunpack.c.l.b16 %v48
    %v81 = vunpack.c.l.b16 %v49
    %v82 = vunpack.c.l.b16 %v50
    %v83 = vunpack.c.l.b16 %v51
    %v84 = vunpack.c.l.b16 %v52
    %v85 = vunpack.c.l.b16 %v53
    %v86 = vunpack.c.l.b16 %v54
    %v87 = vunpack.c.l.b16 %v55
    %v88 = vpack.c.b16 %v73, %v72
    %v89 = vpack.c.b16 %v75, %v74
    %v90 = vpack.c.b16 %v77, %v76
    %v91 = vpack.c.b16 %v79, %v78
    %v92 = vpack.c.b16 %v81, %v80
    %v93 = vpack.c.b16 %v83, %v82
    %v94 = vpack.c.b16 %v85, %v84
    %v95 = vpack.c.b16 %v87, %v86
    %104 = vmatprep.subr.bf16.mxu0 0
    %105 = vmatpush1.bf16.msra.mxu0 %v88
    %106 = vmatprep.subr.bf16.mxu0 0
    %107 = vmatpush1.bf16.msra.mxu0 %v89
    %108 = vmatprep.subr.bf16.mxu0 0
    %109 = vmatpush1.bf16.msra.mxu0 %v90
    %110 = vmatprep.subr.bf16.mxu0 0
    %111 = vmatpush1.bf16.msra.mxu0 %v91
    %112 = vmatprep.subr.bf16.mxu0 0
    %113 = vmatpush1.bf16.msra.mxu0 %v92
    %114 = vmatprep.subr.bf16.mxu0 0
    %115 = vmatpush1.bf16.msra.mxu0 %v93
    %116 = vmatprep.subr.bf16.mxu0 0
    %117 = vmatpush1.bf16.msra.mxu0 %v94
    %118 = vmatprep.subr.bf16.mxu0 0
    %119 = vmatpush1.bf16.msra.mxu0 %v95
    %120 = vmatprep.subr.bf16.mxu0 0
    %121 = vmatpush1.bf16.msra.mxu0 0
    %122 = vmatprep.subr.bf16.mxu0 0
    %123 = vmatpush1.bf16.msra.mxu0 0
    %124 = vmatprep.subr.bf16.mxu0 0
    %125 = vmatpush1.bf16.msra.mxu0 0
    %126 = vmatprep.subr.bf16.mxu0 0
    %127 = vmatpush1.bf16.msra.mxu0 0
    %128 = vmatprep.subr.bf16.mxu0 0
    %129 = vmatpush1.bf16.msra.mxu0 0
    %130 = vmatprep.subr.bf16.mxu0 0
    %131 = vmatpush1.bf16.msra.mxu0 0
    %132 = vmatprep.subr.bf16.mxu0 0
    %133 = vmatpush1.bf16.msra.mxu0 0
    %134 = vmatprep.subr.bf16.mxu0 0
    %135 = vmatpush1.bf16.msra.mxu0 0
    %136 = vmatprep.mubr.bf16.mxu0 0
    %137 = vmatmul.mubr.bf16.gmra.mrb[0].mxu0 %v39
    %v138 = vpop.f32.mrb[0].mxu0
    %v139 = vadd.f32 0.0, %v138
    %v140 = vpop.f32.mrb[0].mxu0
    %v141 = vpop.f32.mrb[0].mxu0
    %v142 = vpop.f32.mrb[0].mxu0
    %143 = vdwg.mxu0
    %v144 = vlaneseq
    %v145 = vand.u32 %v144, 127
    %v146 = vld [vmem:[%s4] sm:$0xff]
    %147 = vset.pattern.permute.xlu0 0
    %148 = vperm.xlu0 %147, %v146
    %v149 = vpop.permute.xlu0 %148
    %vm150 = vcmp.eq.s32.totalorder %v145, %v149
    %v151 = vstv %s38
    %vm152 = vcmp.lt.s32.totalorder %v145, %v151
    %v153 = vstv %s37
    %v154 = vsub.f32 %v139, %v153
    %v155 = vsel %vm150, %v154, %v139
    %v156 = vsel %vm152, %v155, -inf
    %157 = vmax.xlane.f32.xlu0 %v156
    %v158 = vpop.xlane.xlu0 %157
    %v159 = vsub.f32 %v156, %v158
    %v160 = vmul.f32 %v159, 1.442695
    %v161 = vpow.pop %v160
    %162 = vadd.xlane.f32.xlu0 %v161
    %v163 = vpop.xlane.xlu0 %162
    %v164 = vlog2.pop %v163
    %v165 = vmul.f32 %v164, 0.6931472
    %v166 = vadd.f32 %v158, %v165
    %v167 = vsel %vm150, %v156, 0.0
    %168 = vadd.xlane.f32.xlu0 %v167
    %v169 = vpop.xlane.xlu0 %168
    %v170 = vsub.f32 %v166, %v169
    %vm171 = vcmask 7168
    %172 = vst.msk [vmem:[%s5] sm:$0xff] %vm171, %v170
    // Predicated region
    $region26: #{tpu_custom_call.1} parent=1 // pred_check
      _
    $region27: #{tpu_custom_call.1} parent=1 // pred_check_branch
      %174 = sbr.rel (0) target = $region29
    $region28: #{tpu_custom_call.1} parent=1 // pred_region
      _
    $region29: #{tpu_custom_call.1} parent=1 // pred_fallthru
      _
    // Predicated region
    $region30: #{tpu_custom_call.1} parent=1 // pred_check
      _
    $region31: #{tpu_custom_call.1} parent=1 // pred_check_branch
      %176 = sbr.rel (0) target = $region33
    $region32: #{tpu_custom_call.1} parent=1 // pred_region
      _
    $region33: #{tpu_custom_call.1} parent=1 // pred_fallthru
      _
    %177 = vsyncpa [#allocation5], 1

// kernel: tpu_custom_call.1
$region0: #{tpu_custom_call.1}
  #allocation0 [shape = 'u32[]', space=smem, size = 0x4, offset = 0x4, fixed_abs, tag = 'smem constant byte address 0x4 - core index']
  #allocation1 [shape = 'u32[144,128]{1,0:T(1,128)}', space=vmem, size = 0x12000, scoped, tag = 'internal scratch']
  #allocation2 [shape = 'f32[1,1]{1,0:T(1,128)S(6)}', space=smem, size = 0x200, scoped, tag = 'scoped memory for tpu_custom_call.1']
  #allocation3 [shape = 's32[1,1]{1,0:T(1,128)S(6)}', space=smem, size = 0x200, scoped, tag = 'scoped memory for tpu_custom_call.1']
  %s0 = inlined_call_operand.<no memory space> [shape: f32[1,1], index: 0, kind: input, shape index: {}]
  %s1 = inlined_call_operand.<no memory space> [shape: s32[1,1], index: 1, kind: input, shape index: {}]
  %s2 = inlined_call_operand.vmem [shape: bf16[8,128], index: 2, kind: input, shape index: {}]
  %s3 = inlined_call_operand.hbm [shape: bf16[128,128], index: 3, kind: input, shape index: {}]
  %s4 = inlined_call_operand.vmem [shape: s32[8,1], index: 4, kind: input, shape index: {}]
  %s5 = inlined_call_operand.vmem [shape: f32[8,1], index: 5, kind: output, shape index: {}]
  %s6 = sld [smem:[#allocation0]]
  $region34: #{tpu_custom_call.1} parent=0
    _
  %s8 = ssub.s32 1, %s6
  %s9 = scalar_select 0, %s8, %s6
  %10 = sst [smem:[#allocation2]] %s0
  %11 = sst [smem:[#allocation3]] %s1
  $region1: #{tpu_custom_call.1} parent=0
    #allocation4 [shape = 'u8[32768]{0}', space=vmem, size = 0x8000, scoped, tag = 'input window, operand 3, single buffered']
    #allocation5 [shape = 's32[1]{0}', space=sflag, size = 0x4, scoped, tag = 'scoped memory for tpu_custom_call.1']
    %12 = vsyncpa [#allocation5], 0
    // Predicated region
    $region2: #{tpu_custom_call.1} parent=1 // pred_check
      _
    $region3: #{tpu_custom_call.1} parent=1 // pred_check_branch
      %14 = sbr.rel (0) target = $region5
    $region4: #{tpu_custom_call.1} parent=1 // pred_region
      _
    $region5: #{tpu_custom_call.1} parent=1 // pred_fallthru
      _
    // Predicated region
    $region6: #{tpu_custom_call.1} parent=1 // pred_check
      _
    $region7: #{tpu_custom_call.1} parent=1 // pred_check_branch
      %16 = sbr.rel (0) target = $region9
    $region8: #{tpu_custom_call.1} parent=1 // pred_region
      _
    $region9: #{tpu_custom_call.1} parent=1 // pred_fallthru
      _
    // Predicated region
    $region10: #{tpu_custom_call.1} parent=1 // pred_check
      _
    $region11: #{tpu_custom_call.1} parent=1 // pred_check_branch
      %18 = sbr.rel (0) target = $region13
    $region12: #{tpu_custom_call.1} parent=1 // pred_region
      _
    $region13: #{tpu_custom_call.1} parent=1 // pred_fallthru
      _
    // Predicated region
    $region14: #{tpu_custom_call.1} parent=1 // pred_check
      _
    $region15: #{tpu_custom_call.1} parent=1 // pred_check_branch
      %20 = sbr.rel (0) target = $region17
    $region16: #{tpu_custom_call.1} parent=1 // pred_region
      %s22 = ssub.s32 1024, 1024
      %23 = vsyncadd [#allocation5], %s22
      %s24 = sshll.u32 [#allocation4], 4
      %s25 = int_to_ptr.vmem [resolvable:$true] %s24
      %30 = dma.hbm_to_vmem [thread:$0]  %s3, 1024, %s25, [#allocation5], 64, 64, 4
    $region17: #{tpu_custom_call.1} parent=1 // pred_fallthru
      _
    // Predicated region
    $region18: #{tpu_custom_call.1} parent=1 // pred_check
      _
    $region19: #{tpu_custom_call.1} parent=1 // pred_check_branch
      %32 = sbr.rel (0) target = $region21
    $region20: #{tpu_custom_call.1} parent=1 // pred_region
      _
    $region21: #{tpu_custom_call.1} parent=1 // pred_fallthru
      _
    // Predicated region
    $region22: #{tpu_custom_call.1} parent=1 // pred_check
      _
    $region23: #{tpu_custom_call.1} parent=1 // pred_check_branch
      %34 = sbr.rel (0) target = $region25
    $region24: #{tpu_custom_call.1} parent=1 // pred_region
      %35 = dma.done [#allocation5], 1024
    $region25: #{tpu_custom_call.1} parent=1 // pred_fallthru
      _
    %s37 = sld [smem:[#allocation2]]
    %s38 = sld [smem:[#allocation3]]
    %v39 = vld [vmem:[%s2] sm:$0xf]
    %v40 = vld [vmem:[#allocation4] sm:$0xf]
    %v41 = vld [vmem:[#allocation4 + $0x4] sm:$0xf]
    %v42 = vld [vmem:[#allocation4 + $0x8] sm:$0xf]
    %v43 = vld [vmem:[#allocation4 + $0xc] sm:$0xf]
    %v44 = vld [vmem:[#allocation4 + $0x10] sm:$0xf]
    %v45 = vld [vmem:[#allocation4 + $0x14] sm:$0xf]
    %v46 = vld [vmem:[#allocation4 + $0x18] sm:$0xf]
    %v47 = vld [vmem:[#allocation4 + $0x1c] sm:$0xf]
    %v48 = vld [vmem:[#allocation4 + $0x20] sm:$0xf]
    %v49 = vld [vmem:[#allocation4 + $0x24] sm:$0xf]
    %v50 = vld [vmem:[#allocation4 + $0x28] sm:$0xf]
    %v51 = vld [vmem:[#allocation4 + $0x2c] sm:$0xf]
    %v52 = vld [vmem:[#allocation4 + $0x30] sm:$0xf]
    %v53 = vld [vmem:[#allocation4 + $0x34] sm:$0xf]
    %v54 = vld [vmem:[#allocation4 + $0x38] sm:$0xf]
    %v55 = vld [vmem:[#allocation4 + $0x3c] sm:$0xf]
    %v72 = vunpack.c.l.b16 %v40
    %v73 = vunpack.c.l.b16 %v41
    %v74 = vunpack.c.l.b16 %v42
    %v75 = vunpack.c.l.b16 %v43
    %v76 = vunpack.c.l.b16 %v44
    %v77 = vunpack.c.l.b16 %v45
    %v78 = vunpack.c.l.b16 %v46
    %v79 = vunpack.c.l.b16 %v47
    %v80 = vunpack.c.l.b16 %v48
    %v81 = vunpack.c.l.b16 %v49
    %v82 = vunpack.c.l.b16 %v50
    %v83 = vunpack.c.l.b16 %v51
    %v84 = vunpack.c.l.b16 %v52
    %v85 = vunpack.c.l.b16 %v53
    %v86 = vunpack.c.l.b16 %v54
    %v87 = vunpack.c.l.b16 %v55
    %v88 = vpack.c.b16 %v73, %v72
    %v89 = vpack.c.b16 %v75, %v74
    %v90 = vpack.c.b16 %v77, %v76
    %v91 = vpack.c.b16 %v79, %v78
    %v92 = vpack.c.b16 %v81, %v80
    %v93 = vpack.c.b16 %v83, %v82
    %v94 = vpack.c.b16 %v85, %v84
    %v95 = vpack.c.b16 %v87, %v86
    %104 = vmatprep.subr.bf16.mxu0 0
    %105 = vmatpush1.bf16.msra.mxu0 %v88
    %106 = vmatprep.subr.bf16.mxu0 0
    %107 = vmatpush1.bf16.msra.mxu0 %v89
    %108 = vmatprep.subr.bf16.mxu0 0
    %109 = vmatpush1.bf16.msra.mxu0 %v90
    %110 = vmatprep.subr.bf16.mxu0 0
    %111 = vmatpush1.bf16.msra.mxu0 %v91
    %112 = vmatprep.subr.bf16.mxu0 0
    %113 = vmatpush1.bf16.msra.mxu0 %v92
    %114 = vmatprep.subr.bf16.mxu0 0
    %115 = vmatpush1.bf16.msra.mxu0 %v93
    %116 = vmatprep.subr.bf16.mxu0 0
    %117 = vmatpush1.bf16.msra.mxu0 %v94
    %118 = vmatprep.subr.bf16.mxu0 0
    %119 = vmatpush1.bf16.msra.mxu0 %v95
    %120 = vmatprep.subr.bf16.mxu0 0
    %121 = vmatpush1.bf16.msra.mxu0 0
    %122 = vmatprep.subr.bf16.mxu0 0
    %123 = vmatpush1.bf16.msra.mxu0 0
    %124 = vmatprep.subr.bf16.mxu0 0
    %125 = vmatpush1.bf16.msra.mxu0 0
    %126 = vmatprep.subr.bf16.mxu0 0
    %127 = vmatpush1.bf16.msra.mxu0 0
    %128 = vmatprep.subr.bf16.mxu0 0
    %129 = vmatpush1.bf16.msra.mxu0 0
    %130 = vmatprep.subr.bf16.mxu0 0
    %131 = vmatpush1.bf16.msra.mxu0 0
    %132 = vmatprep.subr.bf16.mxu0 0
    %133 = vmatpush1.bf16.msra.mxu0 0
    %134 = vmatprep.subr.bf16.mxu0 0
    %135 = vmatpush1.bf16.msra.mxu0 0
    %136 = vmatprep.mubr.bf16.mxu0 0
    %137 = vmatmul.mubr.bf16.gmra.mrb[0].mxu0 %v39
    %v138 = vpop.f32.mrb[0].mxu0
    %v139 = vadd.f32 0.0, %v138
    %v140 = vpop.f32.mrb[0].mxu0
    %v141 = vpop.f32.mrb[0].mxu0
    %v142 = vpop.f32.mrb[0].mxu0
    %143 = vdwg.mxu0
    %v144 = vlaneseq
    %v145 = vand.u32 %v144, 127
    %v146 = vld [vmem:[%s4] sm:$0xff]
    %147 = vset.pattern.permute.xlu0 0
    %148 = vperm.xlu0 %147, %v146
    %v149 = vpop.permute.xlu0 %148
    %vm150 = vcmp.eq.s32.totalorder %v145, %v149
    %v151 = vstv %s38
    %vm152 = vcmp.lt.s32.totalorder %v145, %v151
    %v153 = vstv %s37
    %v154 = vsub.f32 %v139, %v153
    %v155 = vsel %vm150, %v154, %v139
    %v156 = vsel %vm152, %v155, -inf
    %157 = vmax.xlane.f32.xlu0 %v156
    %v158 = vpop.xlane.xlu0 %157
    %v159 = vsub.f32 %v156, %v158
    %v160 = vmul.f32 %v159, 1.442695
    %v161 = vpow.pop %v160
    %162 = vadd.xlane.f32.xlu0 %v161
    %v163 = vpop.xlane.xlu0 %162
    %v164 = vlog2.pop %v163
    %v165 = vmul.f32 %v164, 0.6931472
    %v166 = vadd.f32 %v158, %v165
    %v167 = vsel %vm150, %v156, 0.0
    %168 = vadd.xlane.f32.xlu0 %v167
    %v169 = vpop.xlane.xlu0 %168
    %v170 = vsub.f32 %v166, %v169
    %vm171 = vcmask 7168
    %172 = vst.msk [vmem:[%s5] sm:$0xff] %vm171, %v170
    // Predicated region
    $region26: #{tpu_custom_call.1} parent=1 // pred_check
      _
    $region27: #{tpu_custom_call.1} parent=1 // pred_check_branch
      %174 = sbr.rel (0) target = $region29
    $region28: #{tpu_custom_call.1} parent=1 // pred_region
      _
    $region29: #{tpu_custom_call.1} parent=1 // pred_fallthru
      _
    // Predicated region
    $region30: #{tpu_custom_call.1} parent=1 // pred_check
      _
    $region31: #{tpu_custom_call.1} parent=1 // pred_check_branch
      %176 = sbr.rel (0) target = $region33
    $region32: #{tpu_custom_call.1} parent=1 // pred_region
      _
    $region33: #{tpu_custom_call.1} parent=1 // pred_fallthru
      _
    %177 = vsyncpa [#allocation5], 1

</llo_original>
